<compile_context>
chip_gen: v7x
topology: tpu7x:2x2x1
jax: 0.10.0
libtpu: 0.0.40
codegen_flags: <defaults>
</compile_context>

<pallas_src>
import functools

import jax
import jax.numpy as jnp
from jax.experimental import pallas as pl
from jax.experimental.pallas import tpu as pltpu


def _round_up(x: int, m: int) -> int:
    return ((x + m - 1) // m) * m


def _gather_vmem_kernel(ids_ref, table_ref, out_ref, *, token_block):
    """Resident-table path: table_ref is a full (vocab, emb_pad) VMEM block.

    ids_ref:   SMEM (n_pad,) int32 token ids (scalar prefetch).
    table_ref: VMEM (vocab, emb_pad) embedding table (resident, DMA'd once).
    out_ref:   VMEM (token_block, emb_pad) output tile (auto-pipelined).
    """
    base = pl.program_id(0) * token_block
    # Fully unrolled: one dynamic-row vector load + one static-row store per
    # token.  No DMAs, no semaphores.
    for t in range(token_block):
        row = ids_ref[base + t]
        out_ref[pl.ds(t, 1), :] = table_ref[pl.ds(row, 1), :]


def _gather_hbm_kernel(ids_ref, table_ref, out_ref, sem_ref, *, token_block):
    """HBM row-gather path: per-row DMAs straight into the output tile.

    ids_ref:   SMEM (n_pad,) int32 token ids (scalar prefetch).
    table_ref: HBM  (vocab, emb_pad) embedding table (memory_space=pl.ANY).
    out_ref:   VMEM (token_block, emb_pad) output tile (auto-pipelined).
    sem_ref:   single shared DMA semaphore.
    """
    base = pl.program_id(0) * token_block

    # Issue every row DMA (unrolled), all against the same semaphore.  All
    # SMEM id reads happen before any wait (preserves sst->sld forwarding).
    for t in range(token_block):
        row = ids_ref[base + t]
        pltpu.make_async_copy(
            table_ref.at[pl.ds(row, 1)],   # (1, emb_pad) row in HBM
            out_ref.at[pl.ds(t, 1)],       # (1, emb_pad) row of the out tile
            sem_ref,
        ).start()

    # One aggregate wait: DMA semaphores accumulate completion bytes, so a
    # descriptor shaped like the whole (token_block, emb_pad) tile waits for
    # exactly the sum of the token_block row copies issued above.  (Only the
    # destination shape/dtype and the semaphore matter for a wait.)
    pltpu.make_async_copy(out_ref, out_ref, sem_ref).wait()


def token_embeddings_pallas(
    token_ids,
    embedding_table,
    *,
    token_block=128,
    vmem_table_bytes=8 << 20,   # tables <= 8 MiB stay resident in VMEM
):
    """Equivalent of TokenEmbeddings.forward (nn.Embedding lookup).

    Args:
      token_ids: int array (batch, seq) with values in [0, vocab_size).
      embedding_table: (vocab_size, emb_size) array.
      token_block: max tokens gathered per grid step (multiple of 8).
      vmem_table_bytes: threshold below which the table is kept VMEM-resident.

    Returns:
      (batch, seq, emb_size) array in the table dtype.
    """
    batch, seq = token_ids.shape
    vocab_size, emb_size = embedding_table.shape
    n = batch * seq
    itemsize = jnp.dtype(embedding_table.dtype).itemsize

    # Lane-pad the embedding dim to a multiple of 128 so both the row DMAs and
    # the output writeback stay on the unmasked lane-dense fast path.
    # TODO(synk): for bf16/int8 tables, additionally pack rows into a u32
    # container before the gather to avoid packed partial-tile row DMAs.
    emb_pad = _round_up(emb_size, 128)
    table = embedding_table
    if emb_pad != emb_size:
        table = jnp.pad(table, ((0, 0), (0, emb_pad - emb_size)))

    # token_block selection:
    #  * multiple of 8 (output sublane tile),
    #  * capped by the problem size,
    #  * capped so the output double-buffer (2 * tb * emb_pad * itemsize)
    #    stays <= ~8 MiB (fits v5e's 16 MiB default scoped VMEM),
    #  * then halved if that would leave a single grid step (v7x has 2 TCs).
    budget_rows = max(8, ((8 << 20) // (2 * emb_pad * itemsize)) // 8 * 8)
    token_block = max(
        8, min(_round_up(token_block, 8), _round_up(n, 8), budget_rows)
    )
    if _round_up(n, token_block) // token_block < 2 and n > 8:
        token_block = max(8, _round_up(pl.cdiv(n, 2), 8))
    n_pad = _round_up(n, token_block)
    grid = (n_pad // token_block,)

    # nn.Embedding would error on out-of-range ids; clamp so the row gather
    # can never go out of bounds.  Pad tokens with id 0 (sliced off below).
    flat_ids = jnp.clip(token_ids.reshape(-1).astype(jnp.int32), 0, vocab_size - 1)
    if n_pad != n:
        flat_ids = jnp.concatenate([flat_ids, jnp.zeros((n_pad - n,), jnp.int32)])

    table_bytes = vocab_size * emb_pad * itemsize
    if table_bytes <= vmem_table_bytes:
        # Fast path: table resident in VMEM (DMA'd once, constant index_map).
        kernel = functools.partial(_gather_vmem_kernel, token_block=token_block)
        in_specs = [pl.BlockSpec((vocab_size, emb_pad), lambda i, ids: (0, 0))]
        scratch_shapes = []
    else:
        # Large table: keep it in HBM, row-gather with per-token DMAs.
        kernel = functools.partial(_gather_hbm_kernel, token_block=token_block)
        in_specs = [pl.BlockSpec(memory_space=pl.ANY)]
        scratch_shapes = [pltpu.SemaphoreType.DMA]

    out = pl.pallas_call(
        kernel,
        out_shape=jax.ShapeDtypeStruct((n_pad, emb_pad), table.dtype),
        grid_spec=pltpu.PrefetchScalarGridSpec(
            num_scalar_prefetch=1,                       # flat ids -> SMEM
            grid=grid,
            in_specs=in_specs,
            out_specs=pl.BlockSpec((token_block, emb_pad), lambda i, ids: (i, 0)),
            scratch_shapes=scratch_shapes,
        ),
        compiler_params=pltpu.CompilerParams(
            dimension_semantics=("parallel",),           # shard steps over TCs
            vmem_limit_bytes=32 << 20,
        ),
    )(flat_ids, table)

    return out[:n, :emb_size].reshape(batch, seq, emb_size)


if __name__ == "__main__":
    # Small deterministic config matching the module's forward:
    # (batch, seq) int token ids -> (batch, seq, emb_size) embeddings.
    vocab_size = 64
    emb_size = 128
    batch, seq = 2, 8

    key = jax.random.PRNGKey(0)
    k_tab, k_ids = jax.random.split(key)

    # Deterministic "nn.Embedding" weight stand-in (~N(0,1), like PyTorch init).
    embedding_table = jax.random.normal(k_tab, (vocab_size, emb_size), jnp.float32)
    token_ids = jax.random.randint(k_ids, (batch, seq), 0, vocab_size, jnp.int32)

    # Reference: plain gather (exactly what nn.Embedding's forward does).
    ref = jnp.take(embedding_table, token_ids, axis=0)

    # Default (VMEM-resident table) path.
    out_vmem = jax.block_until_ready(
        token_embeddings_pallas(token_ids, embedding_table)
    )
    # Forced HBM row-gather path (same kernel family used for big vocabularies).
    out_hbm = jax.block_until_ready(
        token_embeddings_pallas(token_ids, embedding_table, vmem_table_bytes=0)
    )

    assert out_vmem.shape == (batch, seq, emb_size), out_vmem.shape
    assert out_vmem.dtype == jnp.float32, out_vmem.dtype
    assert jnp.array_equal(out_vmem, ref), "VMEM-resident path mismatch vs reference"
    assert jnp.array_equal(out_hbm, ref), "HBM gather path mismatch vs reference"

    print("KERNEL_OK")
</pallas_src>

<mosaic_0001>
module attributes {stable_mosaic.version = 11 : i64} {
  func.func @_gather_vmem_kernel(%arg0: i32, %arg1: memref<16xi32, #tpu.memory_space<smem>>, %arg2: memref<64x128xf32, #tpu.memory_space<vmem>>, %arg3: memref<8x128xf32, #tpu.memory_space<vmem>>) attributes {dimension_semantics = [#tpu.dimension_semantics<parallel>], iteration_bounds = array<i64: 2>, scalar_prefetch = 1 : i64, scratch_operands = 0 : i64, tpu.core_type = #tpu.core_type<tc>, window_params = [{pipeline_mode = #tpu.pipeline_mode<synchronous>, transform_indices = @transform_0, window_bounds = array<i64: 64, 128>}, {transform_indices = @transform_1, window_bounds = array<i64: 8, 128>}]} {
    %c8_i32 = arith.constant 8 : i32
    %0 = arith.muli %arg0, %c8_i32 : i32
    %c0_i32 = arith.constant 0 : i32
    %1 = arith.addi %0, %c0_i32 : i32
    %2 = arith.index_cast %1 : i32 to index
    %3 = memref.load %arg1[%2] : memref<16xi32, #tpu.memory_space<smem>>
    %4 = arith.index_cast %3 : i32 to index
    %c0 = arith.constant 0 : index
    %5 = vector.load %arg2[%4, %c0] : memref<64x128xf32, #tpu.memory_space<vmem>>, vector<1x128xf32>
    %c0_0 = arith.constant 0 : index
    %c0_1 = arith.constant 0 : index
    %6 = vector.load %arg3[%c0_0, %c0_1] : memref<8x128xf32, #tpu.memory_space<vmem>>, vector<1x128xf32>
    tpu.vector_store %arg3[%c0_0, %c0_1], %5 {strides = array<i32>} : memref<8x128xf32, #tpu.memory_space<vmem>>, vector<1x128xf32>,
    %c1_i32 = arith.constant 1 : i32
    %7 = arith.addi %0, %c1_i32 : i32
    %8 = arith.index_cast %7 : i32 to index
    %9 = memref.load %arg1[%8] : memref<16xi32, #tpu.memory_space<smem>>
    %10 = arith.index_cast %9 : i32 to index
    %c0_2 = arith.constant 0 : index
    %11 = vector.load %arg2[%10, %c0_2] : memref<64x128xf32, #tpu.memory_space<vmem>>, vector<1x128xf32>
    %c1 = arith.constant 1 : index
    %c0_3 = arith.constant 0 : index
    %12 = vector.load %arg3[%c1, %c0_3] : memref<8x128xf32, #tpu.memory_space<vmem>>, vector<1x128xf32>
    tpu.vector_store %arg3[%c1, %c0_3], %11 {strides = array<i32>} : memref<8x128xf32, #tpu.memory_space<vmem>>, vector<1x128xf32>,
    %c2_i32 = arith.constant 2 : i32
    %13 = arith.addi %0, %c2_i32 : i32
    %14 = arith.index_cast %13 : i32 to index
    %15 = memref.load %arg1[%14] : memref<16xi32, #tpu.memory_space<smem>>
    %16 = arith.index_cast %15 : i32 to index
    %c0_4 = arith.constant 0 : index
    %17 = vector.load %arg2[%16, %c0_4] : memref<64x128xf32, #tpu.memory_space<vmem>>, vector<1x128xf32>
    %c2 = arith.constant 2 : index
    %c0_5 = arith.constant 0 : index
    %18 = vector.load %arg3[%c2, %c0_5] : memref<8x128xf32, #tpu.memory_space<vmem>>, vector<1x128xf32>
    tpu.vector_store %arg3[%c2, %c0_5], %17 {strides = array<i32>} : memref<8x128xf32, #tpu.memory_space<vmem>>, vector<1x128xf32>,
    %c3_i32 = arith.constant 3 : i32
    %19 = arith.addi %0, %c3_i32 : i32
    %20 = arith.index_cast %19 : i32 to index
    %21 = memref.load %arg1[%20] : memref<16xi32, #tpu.memory_space<smem>>
    %22 = arith.index_cast %21 : i32 to index
    %c0_6 = arith.constant 0 : index
    %23 = vector.load %arg2[%22, %c0_6] : memref<64x128xf32, #tpu.memory_space<vmem>>, vector<1x128xf32>
    %c3 = arith.constant 3 : index
    %c0_7 = arith.constant 0 : index
    %24 = vector.load %arg3[%c3, %c0_7] : memref<8x128xf32, #tpu.memory_space<vmem>>, vector<1x128xf32>
    tpu.vector_store %arg3[%c3, %c0_7], %23 {strides = array<i32>} : memref<8x128xf32, #tpu.memory_space<vmem>>, vector<1x128xf32>,
    %c4_i32 = arith.constant 4 : i32
    %25 = arith.addi %0, %c4_i32 : i32
    %26 = arith.index_cast %25 : i32 to index
    %27 = memref.load %arg1[%26] : memref<16xi32, #tpu.memory_space<smem>>
    %28 = arith.index_cast %27 : i32 to index
    %c0_8 = arith.constant 0 : index
    %29 = vector.load %arg2[%28, %c0_8] : memref<64x128xf32, #tpu.memory_space<vmem>>, vector<1x128xf32>
    %c4 = arith.constant 4 : index
    %c0_9 = arith.constant 0 : index
    %30 = vector.load %arg3[%c4, %c0_9] : memref<8x128xf32, #tpu.memory_space<vmem>>, vector<1x128xf32>
    tpu.vector_store %arg3[%c4, %c0_9], %29 {strides = array<i32>} : memref<8x128xf32, #tpu.memory_space<vmem>>, vector<1x128xf32>,
    %c5_i32 = arith.constant 5 : i32
    %31 = arith.addi %0, %c5_i32 : i32
    %32 = arith.index_cast %31 : i32 to index
    %33 = memref.load %arg1[%32] : memref<16xi32, #tpu.memory_space<smem>>
    %34 = arith.index_cast %33 : i32 to index
    %c0_10 = arith.constant 0 : index
    %35 = vector.load %arg2[%34, %c0_10] : memref<64x128xf32, #tpu.memory_space<vmem>>, vector<1x128xf32>
    %c5 = arith.constant 5 : index
    %c0_11 = arith.constant 0 : index
    %36 = vector.load %arg3[%c5, %c0_11] : memref<8x128xf32, #tpu.memory_space<vmem>>, vector<1x128xf32>
    tpu.vector_store %arg3[%c5, %c0_11], %35 {strides = array<i32>} : memref<8x128xf32, #tpu.memory_space<vmem>>, vector<1x128xf32>,
    %c6_i32 = arith.constant 6 : i32
    %37 = arith.addi %0, %c6_i32 : i32
    %38 = arith.index_cast %37 : i32 to index
    %39 = memref.load %arg1[%38] : memref<16xi32, #tpu.memory_space<smem>>
    %40 = arith.index_cast %39 : i32 to index
    %c0_12 = arith.constant 0 : index
    %41 = vector.load %arg2[%40, %c0_12] : memref<64x128xf32, #tpu.memory_space<vmem>>, vector<1x128xf32>
    %c6 = arith.constant 6 : index
    %c0_13 = arith.constant 0 : index
    %42 = vector.load %arg3[%c6, %c0_13] : memref<8x128xf32, #tpu.memory_space<vmem>>, vector<1x128xf32>
    tpu.vector_store %arg3[%c6, %c0_13], %41 {strides = array<i32>} : memref<8x128xf32, #tpu.memory_space<vmem>>, vector<1x128xf32>,
    %c7_i32 = arith.constant 7 : i32
    %43 = arith.addi %0, %c7_i32 : i32
    %44 = arith.index_cast %43 : i32 to index
    %45 = memref.load %arg1[%44] : memref<16xi32, #tpu.memory_space<smem>>
    %46 = arith.index_cast %45 : i32 to index
    %c0_14 = arith.constant 0 : index
    %47 = vector.load %arg2[%46, %c0_14] : memref<64x128xf32, #tpu.memory_space<vmem>>, vector<1x128xf32>
    %c7 = arith.constant 7 : index
    %c0_15 = arith.constant 0 : index
    %48 = vector.load %arg3[%c7, %c0_15] : memref<8x128xf32, #tpu.memory_space<vmem>>, vector<1x128xf32>
    tpu.vector_store %arg3[%c7, %c0_15], %47 {strides = array<i32>} : memref<8x128xf32, #tpu.memory_space<vmem>>, vector<1x128xf32>,
    return
  }
  func.func @transform_0(%arg0: i32, %arg1: memref<16xi32, #tpu.memory_space<smem>>) -> (i32, i32) {
    %c0_i32 = arith.constant 0 : i32
    %c0_i32_0 = arith.constant 0 : i32
    %c0_i32_1 = arith.constant 0 : i32
    return %c0_i32, %c0_i32_0 : i32, i32
  }
  func.func @transform_1(%arg0: i32, %arg1: memref<16xi32, #tpu.memory_space<smem>>) -> (i32, i32) {
    %c0_i32 = arith.constant 0 : i32
    %c0_i32_0 = arith.constant 0 : i32
    return %arg0, %c0_i32 : i32, i32
  }
}

</mosaic_0001>

<llo_original>
// kernel: tpu_custom_call.1
$region0: #{tpu_custom_call.1}
  #allocation0 [shape = 'u32[]', space=smem, size = 0x4, offset = 0x4, fixed_abs, tag = 'smem constant byte address 0x4 - core index']
  #allocation1 [shape = 'u32[144,128]{1,0:T(1,128)}', space=vmem, size = 0x12000, scoped, tag = 'internal scratch']
  #allocation2 [shape = 's32[1]{0}', space=sflag, size = 0x4, scoped, tag = 'scoped memory for tpu_custom_call.1']
  #allocation3 [shape = 'u8[512]{0}', space=smem, size = 0x200, scoped, tag = 'prefetched SMEM operand 0']
  %s0 = inlined_call_operand.hbm [shape: s32[16], index: 0, kind: input, shape index: {}]
  %s1 = inlined_call_operand.hbm [shape: f32[64,128], index: 1, kind: input, shape index: {}]
  %s2 = inlined_call_operand.hbm [shape: f32[16,128], index: 2, kind: output, shape index: {}]
  %s3 = sld [smem:[#allocation0]]
  $region41: #{tpu_custom_call.1} parent=0
    _
  %s5 = ssub.s32 1, %s3
  %s6 = scalar_select 0, %s5, %s3
  %8 = dma.hbm_to_smem %s0, 16, [#allocation3], [#allocation2]
  %9 = dma.done [#allocation2], 16
  %10 = sfence
  $region1: #{tpu_custom_call.1} parent=0
    #allocation4 [shape = 'u8[32768]{0}', space=vmem, size = 0x8000, scoped, tag = 'input window, operand 1, single buffered']
    #allocation5 [shape = 's32[2]{0}', space=sflag, size = 0x8, scoped, tag = 'scoped memory for tpu_custom_call.1']
    #allocation6 [shape = 's32[2]{0}', space=sflag, size = 0x8, scoped, tag = 'scoped memory for tpu_custom_call.1']
    #allocation7 [shape = 'u8[8192]{0}', space=vmem, size = 0x2000, scoped, tag = 'output window, operand 0']
    %11 = vsyncpa [#allocation5], 0
    %12 = vsyncpa [#allocation6], 0
    %s13 = scalar_lea.sflag [#allocation6], 1
    %14 = vsyncpa %s13, 0
    loop: start=0, step=1, limit=4
    $region2: #{tpu_custom_call.1} parent=1 // loop_pre_header
      _
    $region3: #{tpu_custom_call.1} parent=1 // loop_header
      %s16 = sphi 0, %s20
      %p17 = scmp.ge.s32.totalorder %s16, 4
      %s24 = sphi 0, %s24
      %s26 = sphi 0, %s24
      %s27 = sphi 0, %s26
      %s41 = sphi 0, %s27
      %s47 = sphi 0, %s49
      %s50 = sphi 0, %s47
      %s51 = sphi 0, %s50
      %s67 = sphi 0, %s51
    $region4: #{tpu_custom_call.1} parent=1 // loop_header_branch
      %19 = sbr.rel (%p17) target = $region8
    $region5: #{tpu_custom_call.1} parent=1 // loop_body
      %s21 = ssub.s32 %s16, 1
      %s22 = ssub.s32 %s16, 2
      %s23 = sadd.s32 %s16, 1
      %s25 = sadd.s32 %s24, 1
      %p28 = scmp.eq.s32.totalorder %s16, 1
      %p29 = scmp.ne.s32.totalorder %s24, %s26
      %p30 = scmp.eq.s32.totalorder %s16, 0
      %p31 = por %p29, %p30
      %p32 = scmp.ne.s32.totalorder %s24, %s26
      %p33 = scmp.eq.s32.totalorder %s21, 1
      %p34 = por %p32, %p33
      %p35 = scmp.ne.s32.totalorder %s26, %s27
      %p36 = scmp.eq.s32.totalorder %s21, 0
      %p37 = por %p35, %p36
      %p38 = scmp.ne.s32.totalorder %s26, %s27
      %p39 = scmp.eq.s32.totalorder %s22, 1
      %p40 = por %p38, %p39
      %p42 = scmp.ne.s32.totalorder %s27, %s41
      %p43 = scmp.eq.s32.totalorder %s22, 0
      %p44 = por %p42, %p43
      %s45 = ssub.s32 %s16, %s23
      %p46 = scmp.eq.s32.totalorder %s45, 0
      %s48 = sadd.s32 %s47, 1
      %s49 = scalar_select %p46, %s47, %s48
      %p52 = pneg %p46
      %p53 = scmp.eq.s32.totalorder %s16, 1
      %p54 = por %p52, %p53
      %p55 = scmp.ne.s32.totalorder %s47, %s50
      %p56 = scmp.eq.s32.totalorder %s16, 0
      %p57 = por %p55, %p56
      %p58 = scmp.ne.s32.totalorder %s47, %s50
      %p59 = scmp.eq.s32.totalorder %s21, 1
      %p60 = por %p58, %p59
      %p61 = scmp.ne.s32.totalorder %s50, %s51
      %p62 = scmp.eq.s32.totalorder %s21, 0
      %p63 = por %p61, %p62
      %p64 = scmp.ne.s32.totalorder %s50, %s51
      %p65 = scmp.eq.s32.totalorder %s22, 1
      %p66 = por %p64, %p65
      %p68 = scmp.ne.s32.totalorder %s51, %s67
      %p69 = scmp.eq.s32.totalorder %s22, 0
      %p70 = por %p68, %p69
      %p71 = scmp.le.s32.totalorder 1, %s16
      %p72 = scmp.lt.s32.totalorder %s16, 3
      %p73 = pnand %p71, %p72
      %p74 = pneg %p73
      // Predicated region
      $region9: #{tpu_custom_call.1} parent=5 // pred_check
        _
      $region10: #{tpu_custom_call.1} parent=5 // pred_check_branch
        %76 = sbr.rel (%p73) target = $region12
      $region11: #{tpu_custom_call.1} parent=5 // pred_region
        %s77 = ssub.s32 %s16, 1
        // Predicated region
        $region13: #{tpu_custom_call.1} parent=11 // pred_check
          %p78 = pneg %p37
        $region14: #{tpu_custom_call.1} parent=11 // pred_check_branch
          %80 = sbr.rel (%p78) target = $region16
        $region15: #{tpu_custom_call.1} parent=11 // pred_region
          %s82 = ssub.s32 1024, 1024
          %83 = vsyncadd [#allocation5], %s82
          %s84 = sshll.u32 [#allocation4], 4
          %s85 = int_to_ptr.vmem [resolvable:$true] %s84
          %90 = dma.hbm_to_vmem [thread:$0]  %s1, 1024, %s85, [#allocation5], 128, 128, 8
        $region16: #{tpu_custom_call.1} parent=11 // pred_fallthru
          _
      $region12: #{tpu_custom_call.1} parent=5 // pred_fallthru
        _
      %p91 = scmp.lt.s32.totalorder %s16, 2
      // Predicated region
      $region17: #{tpu_custom_call.1} parent=5 // pred_check
        %p92 = pneg %p91
      $region18: #{tpu_custom_call.1} parent=5 // pred_check_branch
        %94 = sbr.rel (%p92) target = $region20
      $region19: #{tpu_custom_call.1} parent=5 // pred_region
        _
      $region20: #{tpu_custom_call.1} parent=5 // pred_fallthru
        _
      %p95 = scmp.le.s32.totalorder 1, %s16
      %p96 = scmp.lt.s32.totalorder %s16, 3
      %p97 = pnand %p95, %p96
      %p98 = pneg %p97
      // Predicated region
      $region21: #{tpu_custom_call.1} parent=5 // pred_check
        _
      $region22: #{tpu_custom_call.1} parent=5 // pred_check_branch
        %100 = sbr.rel (%p97) target = $region24
      $region23: #{tpu_custom_call.1} parent=5 // pred_region
        %s101 = ssub.s32 %s16, 1
        // Predicated region
        $region25: #{tpu_custom_call.1} parent=23 // pred_check
          %p102 = pneg %p37
        $region26: #{tpu_custom_call.1} parent=23 // pred_check_branch
          %104 = sbr.rel (%p102) target = $region28
        $region27: #{tpu_custom_call.1} parent=23 // pred_region
          %105 = dma.done [#allocation5], 1024
        $region28: #{tpu_custom_call.1} parent=23 // pred_fallthru
          _
        %p106 = pneg %p37
        %p107 = pneg %p34
        %p108 = pneg %p63
        %p109 = pneg %p60
        %s110 = sand.u32 %s50, 1
        %s111 = scalar_lea.sflag [#allocation6], %s110
        %s112 = sand.u32 %s50, 1
        %s113 = smul.addr %s112, 8
        %s114 = scalar_lea.vmem [#allocation7], %s113
        %s115 = smul.u32 %s21, 8
        %s116 = sld [smem:[#allocation3 + %s115]]
        %s117 = scalar_lea.vmem [#allocation4], %s116
        %v118 = vld [vmem:[%s117] sm:$0x1]
        %119 = vst [vmem:[%s114] sm:$0x1] %v118
        %s120 = sadd.s32 %s115, 1
        %s121 = sld [smem:[#allocation3 + %s120]]
        %s122 = scalar_lea.vmem [#allocation4], %s121
        %v123 = vld [vmem:[%s122] sm:$0x1]
        %124 = vst [vmem:[%s114 + $0x1] sm:$0x1] %v123
        %s125 = sadd.s32 %s115, 2
        %s126 = sld [smem:[#allocation3 + %s125]]
        %s127 = scalar_lea.vmem [#allocation4], %s126
        %v128 = vld [vmem:[%s127] sm:$0x1]
        %129 = vst [vmem:[%s114 + $0x2] sm:$0x1] %v128
        %s130 = sadd.s32 %s115, 3
        %s131 = sld [smem:[#allocation3 + %s130]]
        %s132 = scalar_lea.vmem [#allocation4], %s131
        %v133 = vld [vmem:[%s132] sm:$0x1]
        %134 = vst [vmem:[%s114 + $0x3] sm:$0x1] %v133
        %s135 = sadd.s32 %s115, 4
        %s136 = sld [smem:[#allocation3 + %s135]]
        %s137 = scalar_lea.vmem [#allocation4], %s136
        %v138 = vld [vmem:[%s137] sm:$0x1]
        %139 = vst [vmem:[%s114 + $0x4] sm:$0x1] %v138
        %s140 = sadd.s32 %s115, 5
        %s141 = sld [smem:[#allocation3 + %s140]]
        %s142 = scalar_lea.vmem [#allocation4], %s141
        %v143 = vld [vmem:[%s142] sm:$0x1]
        %144 = vst [vmem:[%s114 + $0x5] sm:$0x1] %v143
        %s145 = sadd.s32 %s115, 6
        %s146 = sld [smem:[#allocation3 + %s145]]
        %s147 = scalar_lea.vmem [#allocation4], %s146
        %v148 = vld [vmem:[%s147] sm:$0x1]
        %149 = vst [vmem:[%s114 + $0x6] sm:$0x1] %v148
        %s150 = sadd.s32 %s115, 7
        %s151 = sld [smem:[#allocation3 + %s150]]
        %s152 = scalar_lea.vmem [#allocation4], %s151
        %v153 = vld [vmem:[%s152] sm:$0x1]
        %154 = vst [vmem:[%s114 + $0x7] sm:$0x1] %v153
        %s155 = sand.u32 %s50, 1
        %s156 = scalar_lea.sflag [#allocation6], %s155
        %s157 = sand.u32 %s50, 1
        %s158 = smul.addr %s157, 8
        %s159 = scalar_lea.vmem [#allocation7], %s158
        // Predicated region
        $region29: #{tpu_custom_call.1} parent=23 // pred_check
          %p160 = pneg %p60
        $region30: #{tpu_custom_call.1} parent=23 // pred_check_branch
          %162 = sbr.rel (%p160) target = $region32
        $region31: #{tpu_custom_call.1} parent=23 // pred_region
          %s164 = ssub.s32 128, 128
          %165 = vsyncadd %s156, %s164
          %s166 = smul.addr %s21, 128
          %s167 = scalar_lea.hbm %s2, %s166
          %s169 = sshll.u32 %s159, 4
          %s170 = int_to_ptr.vmem [resolvable:$true] %s169
          %172 = dma.vmem_to_hbm [thread:$0]  %s170, 128, %s167, %s156
        $region32: #{tpu_custom_call.1} parent=23 // pred_fallthru
          _
      $region24: #{tpu_custom_call.1} parent=5 // pred_fallthru
        _
      %p173 = scmp.le.s32.totalorder 2, %s16
      // Predicated region
      $region33: #{tpu_custom_call.1} parent=5 // pred_check
        %p174 = pneg %p173
      $region34: #{tpu_custom_call.1} parent=5 // pred_check_branch
        %176 = sbr.rel (%p174) target = $region36
      $region35: #{tpu_custom_call.1} parent=5 // pred_region
        %s177 = ssub.s32 %s16, 2
        // Predicated region
        $region37: #{tpu_custom_call.1} parent=35 // pred_check
          %p178 = pneg %p66
        $region38: #{tpu_custom_call.1} parent=35 // pred_check_branch
          %180 = sbr.rel (%p178) target = $region40
        $region39: #{tpu_custom_call.1} parent=35 // pred_region
          %s181 = sand.u32 %s51, 1
          %s182 = scalar_lea.sflag [#allocation6], %s181
          %s183 = sand.u32 %s51, 1
          %s184 = smul.addr %s183, 8
          %s185 = scalar_lea.vmem [#allocation7], %s184
          %186 = dma.done %s182, 128
        $region40: #{tpu_custom_call.1} parent=35 // pred_fallthru
          _
      $region36: #{tpu_custom_call.1} parent=5 // pred_fallthru
        _
    $region6: #{tpu_custom_call.1} parent=1 // loop_footer
      %s20 = sadd.s32 1, %s16
    $region7: #{tpu_custom_call.1} parent=1 // loop_footer_branch
      %15 = sbr.rel target = $region3
    $region8: #{tpu_custom_call.1} parent=1 // loop_exit
      _
    %187 = vsyncpa [#allocation5], 1
    %s188 = scalar_lea.sflag [#allocation5], 1
    %189 = vsyncpa %s188, 1
    %190 = vsyncpa [#allocation6], 1
    %s191 = scalar_lea.sflag [#allocation6], 1
    %192 = vsyncpa %s191, 1

</llo_original>
